<compile_context>
chip_gen: v7x
topology: tpu7x:2x2x1
jax: 0.10.0
libtpu: 0.0.40
codegen_flags: <defaults>
</compile_context>

<pallas_src>
import math

import jax
import jax.numpy as jnp
from jax import lax
from jax.experimental import pallas as pl
from jax.experimental.pallas import tpu as pltpu


def _ceil_to(x, m):
    return -(-x // m) * m


def conv_ps_layer_forward(x_nchw, w_oihw, bias, *, stride, upsample, tile_rows=None):
    """ReflectionPad2d(k//2) -> Conv2d(Cin, Cout*u^2, k, stride) -> PixelShuffle(u)."""
    N, Cin, H, W = x_nchw.shape
    Cconv, Cin_w, K, K2 = w_oihw.shape              # Cconv = Cout * upsample**2
    assert Cin == Cin_w and K == K2
    u = int(upsample) if upsample else 1
    assert Cconv % (u * u) == 0
    Cout = Cconv // (u * u)

    pad = K // 2
    assert pad < H and pad < W, "ReflectionPad2d requires kernel_size//2 < H and < W"
    Hp, Wp = H + 2 * pad, W + 2 * pad
    Ho = (Hp - K) // stride + 1
    Wo = (Wp - K) // stride + 1

    CK = K * K * Cin
    CKpad = _ceil_to(CK, 128)       # contraction depth: unmasked lhs lanes, full MXU depth
    Cpad = _ceil_to(Cconv, 128)     # lane-dense (unmasked) output stores
    Wo_pad = _ceil_to(Wo, 8)        # keeps row-tile blocks sublane aligned

    # ---- hardware-aware VMEM budget & row-tile size ------------------------
    try:
        vmem_cap = int(pltpu.get_tpu_info().vmem_capacity_bytes)
    except Exception:               # conservative default = v7x (64 MiB per TC)
        vmem_cap = 64 * 2**20
    vmem_limit = int(min(vmem_cap // 2, 64 * 2**20))   # ~32 MiB on v7x, ~64 MiB on v5e/v6e

    w_bytes = CKpad * Cpad * 2
    b_bytes = Cpad * 4
    per_row = 2 * Wo_pad * (CKpad + Cpad) * 2          # dbl-buffered bf16 in + bf16 out / row
    budget = max(per_row, int(0.6 * vmem_limit) - 2 * (w_bytes + b_bytes))

    if tile_rows is None:
        TH = max(1, min(Ho, budget // per_row))
        nT = -(-Ho // TH)
        # v7x has 2 TensorCores: make sure the parallel grid splits evenly at tiny batch.
        if N * nT < 4:
            nT = min(Ho, max(nT, -(-4 // max(N, 1))))
            TH = -(-Ho // nT)
            nT = -(-Ho // TH)
    else:
        TH = int(tile_rows)
        assert 1 <= TH <= Ho, (TH, Ho)
        nT = -(-Ho // TH)
    Ho_pad = nT * TH                                   # ragged last tile handled by zero-pad

    # ---- wrapper glue: reflect pad, NHWC, full K*K*Cin im2col ---------------
    xp = jnp.pad(x_nchw, ((0, 0), (0, 0), (pad, pad), (pad, pad)), mode="reflect")
    xp = jnp.transpose(xp, (0, 2, 3, 1)).astype(jnp.bfloat16)            # (N, Hp, Wp, Cin)

    # xf[n, ho, wo, (kh*K + kw)*Cin + c] = xp[n, ho*stride + kh, wo*stride + kw, c]
    cols = [xp[:, kh: kh + (Ho - 1) * stride + 1: stride,
               kw: kw + (Wo - 1) * stride + 1: stride, :]
            for kh in range(K) for kw in range(K)]
    xf = jnp.concatenate(cols, axis=-1)                                   # (N, Ho, Wo, CK)
    xf = jnp.pad(xf, ((0, 0), (0, Ho_pad - Ho), (0, Wo_pad - Wo), (0, CKpad - CK)))
    xf = xf.reshape(N, Ho_pad * Wo_pad, CKpad)                            # disjoint row tiles

    # weights: (Cconv, Cin, K, K) -> (K*K*Cin, Cconv) -> zero-pad to (CKpad, Cpad)
    wf = jnp.transpose(w_oihw, (2, 3, 1, 0)).reshape(CK, Cconv)
    wf = jnp.pad(wf, ((0, CKpad - CK), (0, Cpad - Cconv))).astype(jnp.bfloat16)
    b2 = jnp.pad(bias, (0, Cpad - Cconv)).reshape(1, Cpad).astype(jnp.float32)

    TW = TH * Wo_pad                                                      # output rows / tile

    # ---- kernel: one deep MXU matmul per tile, bias add, single bf16 store --
    def conv_kernel(x_ref, w_ref, b_ref, o_ref):
        # x_ref: (1, TW, CKpad) bf16   w_ref: (CKpad, Cpad) bf16
        # b_ref: (1, Cpad) f32         o_ref: (1, TW, Cpad) bf16
        acc = jnp.dot(x_ref[0], w_ref[...], preferred_element_type=jnp.float32)
        o_ref[0] = (acc + b_ref[...]).astype(o_ref.dtype)

    # weights/bias have constant index maps (fetched once); counted twice here instead
    # of using pipeline_mode=pl.Buffered(1).
    est = 2 * (TW * CKpad * 2 + TW * Cpad * 2) + 2 * (w_bytes + b_bytes) + (1 << 20)
    vmem_limit_bytes = int(min(vmem_cap * 7 // 8, max(vmem_limit, est)))

    out_rows = pl.pallas_call(
        conv_kernel,
        out_shape=jax.ShapeDtypeStruct((N, Ho_pad * Wo_pad, Cpad), jnp.bfloat16),
        grid_spec=pltpu.PrefetchScalarGridSpec(
            num_scalar_prefetch=0,
            grid=(N, nT),
            in_specs=[
                pl.BlockSpec((1, TW, CKpad), lambda n, t: (n, t, 0)),
                pl.BlockSpec((CKpad, Cpad), lambda n, t: (0, 0)),
                pl.BlockSpec((1, Cpad), lambda n, t: (0, 0)),
            ],
            out_specs=pl.BlockSpec((1, TW, Cpad), lambda n, t: (n, t, 0)),
        ),
        compiler_params=pltpu.CompilerParams(
            dimension_semantics=("parallel", "parallel"),
            vmem_limit_bytes=vmem_limit_bytes,
        ),
    )(xf, wf, b2)

    # ---- strip padding, pixel shuffle, back to NCHW f32 ---------------------
    out = out_rows.reshape(N, Ho_pad, Wo_pad, Cpad)[:, :Ho, :Wo, :Cconv]   # bf16
    if u > 1:
        y = out.reshape(N, Ho, Wo, Cout, u, u)                # ch = c*u^2 + i*u + j
        y = jnp.transpose(y, (0, 1, 4, 2, 5, 3))              # (N, Ho, i, Wo, j, Cout)
        out = y.reshape(N, Ho * u, Wo * u, Cout)
    return jnp.transpose(out, (0, 3, 1, 2)).astype(jnp.float32)            # NCHW


def _reference(x_nchw, w_oihw, bias, stride, upsample):
    """Pure-JAX reference (XLA conv + pixel shuffle) with bf16-rounded inputs to match
    the kernel's bf16 MXU path (f32 accumulation). The kernel additionally stores in
    bf16, so comparison uses a bf16-level tolerance."""
    xq = x_nchw.astype(jnp.bfloat16).astype(jnp.float32)
    wq = w_oihw.astype(jnp.bfloat16).astype(jnp.float32)
    K = w_oihw.shape[2]
    pad = K // 2
    xp = jnp.pad(xq, ((0, 0), (0, 0), (pad, pad), (pad, pad)), mode="reflect")
    y = lax.conv_general_dilated(xp, wq, window_strides=(stride, stride),
                                 padding="VALID",
                                 dimension_numbers=("NCHW", "OIHW", "NCHW"))
    y = y + bias.reshape(1, -1, 1, 1)
    n, c2, ho, wo = y.shape
    r = int(upsample) if upsample else 1
    if r > 1:
        c = c2 // (r * r)
        y = y.reshape(n, c, r, r, ho, wo)
        y = jnp.transpose(y, (0, 1, 4, 2, 5, 3))
        y = y.reshape(n, c, ho * r, wo * r)
    return y


if __name__ == "__main__":
    # ConvPSLayer(in_channels=4, out_channels=8, kernel_size=3, stride=1, upsample=2)
    # applied to x of shape (2, 4, 16, 16)  ->  output (2, 8, 32, 32).
    N, Cin, H, W = 2, 4, 16, 16
    Cout, K, stride, upsample = 8, 3, 1, 2
    Cconv = Cout * upsample * upsample

    key = jax.random.PRNGKey(0)
    kx, kw, kb = jax.random.split(key, 3)
    x = jax.random.normal(kx, (N, Cin, H, W), dtype=jnp.float32)

    # PyTorch Conv2d default init: U(-1/sqrt(fan_in), 1/sqrt(fan_in)) for w and b.
    fan_in = Cin * K * K
    bound = 1.0 / math.sqrt(fan_in)
    w = jax.random.uniform(kw, (Cconv, Cin, K, K), jnp.float32,
                           minval=-bound, maxval=bound)
    b = jax.random.uniform(kb, (Cconv,), jnp.float32, minval=-bound, maxval=bound)

    # Auto tile picker: splits Ho into 2 row tiles here (grid (2, 2)), exercising
    # the ragged-safe tiling path and the megacore grid balancing.
    out = conv_ps_layer_forward(x, w, b, stride=stride, upsample=upsample)
    out = jax.block_until_ready(out)

    Ho = (H + 2 * (K // 2) - K) // stride + 1
    Wo = (W + 2 * (K // 2) - K) // stride + 1
    assert out.shape == (N, Cout, Ho * upsample, Wo * upsample), out.shape

    ref = _reference(x, w, b, stride, upsample)
    # bf16 output store -> compare at bf16-level tolerance against the f32 reference.
    if not jnp.allclose(out, ref, atol=2e-2, rtol=2e-2):
        raise AssertionError(
            f"Pallas ConvPSLayer mismatch, max |diff| = "
            f"{float(jnp.max(jnp.abs(out - ref)))}")

    print("KERNEL_OK")
</pallas_src>

<mosaic_0001>
module attributes {stable_mosaic.version = 11 : i64} {
  func.func @conv_kernel(%arg0: i32, %arg1: i32, %arg2: memref<1x128x128xbf16, #tpu.memory_space<vmem>>, %arg3: memref<128x128xbf16, #tpu.memory_space<vmem>>, %arg4: memref<1x128xf32, #tpu.memory_space<vmem>>, %arg5: memref<1x128x128xbf16, #tpu.memory_space<vmem>>) attributes {dimension_semantics = [#tpu.dimension_semantics<parallel>, #tpu.dimension_semantics<parallel>], iteration_bounds = array<i64: 2, 2>, scalar_prefetch = 0 : i64, scratch_operands = 0 : i64, tpu.core_type = #tpu.core_type<tc>, window_params = [{transform_indices = @transform_0, window_bounds = array<i64: 1, 128, 128>}, {pipeline_mode = #tpu.pipeline_mode<synchronous>, transform_indices = @transform_1, window_bounds = array<i64: 128, 128>}, {pipeline_mode = #tpu.pipeline_mode<synchronous>, transform_indices = @transform_2, window_bounds = array<i64: 1, 128>}, {transform_indices = @transform_3, window_bounds = array<i64: 1, 128, 128>}]} {
    %c0 = arith.constant 0 : index
    %c0_0 = arith.constant 0 : index
    %c0_1 = arith.constant 0 : index
    %0 = vector.load %arg2[%c0, %c0_0, %c0_1] : memref<1x128x128xbf16, #tpu.memory_space<vmem>>, vector<1x128x128xbf16>
    %1 = vector.shape_cast %0 : vector<1x128x128xbf16> to vector<128x128xbf16>
    %c0_2 = arith.constant 0 : index
    %c0_3 = arith.constant 0 : index
    %2 = vector.load %arg3[%c0_2, %c0_3] : memref<128x128xbf16, #tpu.memory_space<vmem>>, vector<128x128xbf16>
    %cst = arith.constant dense<0.000000e+00> : vector<128x128xf32>
    %3 = tpu.matmul %1, %2, %cst {dimension_numbers = #tpu.dot_dimension_numbers<[1], [0], [0], [1], [0, 0, 1, 1], [], []>} : vector<128x128xbf16>, vector<128x128xbf16>, vector<128x128xf32> -> vector<128x128xf32>
    %c0_4 = arith.constant 0 : index
    %c0_5 = arith.constant 0 : index
    %4 = vector.load %arg4[%c0_4, %c0_5] : memref<1x128xf32, #tpu.memory_space<vmem>>, vector<1x128xf32>
    %5 = vector.broadcast %4 : vector<1x128xf32> to vector<128x128xf32>
    %6 = arith.addf %3, %5 : vector<128x128xf32>
    %7 = arith.truncf %6 : vector<128x128xf32> to vector<128x128xbf16>
    %c0_6 = arith.constant 0 : index
    %c0_7 = arith.constant 0 : index
    %c0_8 = arith.constant 0 : index
    %8 = vector.load %arg5[%c0_6, %c0_7, %c0_8] : memref<1x128x128xbf16, #tpu.memory_space<vmem>>, vector<1x128x128xbf16>
    %9 = vector.shape_cast %8 : vector<1x128x128xbf16> to vector<128x128xbf16>
    %10 = vector.shape_cast %7 : vector<128x128xbf16> to vector<1x128x128xbf16>
    tpu.vector_store %arg5[%c0_6, %c0_7, %c0_8], %10 {strides = array<i32>} : memref<1x128x128xbf16, #tpu.memory_space<vmem>>, vector<1x128x128xbf16>,
    return
  }
  func.func @transform_0(%arg0: i32, %arg1: i32) -> (i32, i32, i32) {
    %c0_i32 = arith.constant 0 : i32
    %c0_i32_0 = arith.constant 0 : i32
    return %arg0, %arg1, %c0_i32 : i32, i32, i32
  }
  func.func @transform_1(%arg0: i32, %arg1: i32) -> (i32, i32) {
    %c0_i32 = arith.constant 0 : i32
    %c0_i32_0 = arith.constant 0 : i32
    %c0_i32_1 = arith.constant 0 : i32
    return %c0_i32, %c0_i32_0 : i32, i32
  }
  func.func @transform_2(%arg0: i32, %arg1: i32) -> (i32, i32) {
    %c0_i32 = arith.constant 0 : i32
    %c0_i32_0 = arith.constant 0 : i32
    %c0_i32_1 = arith.constant 0 : i32
    return %c0_i32, %c0_i32_0 : i32, i32
  }
  func.func @transform_3(%arg0: i32, %arg1: i32) -> (i32, i32, i32) {
    %c0_i32 = arith.constant 0 : i32
    %c0_i32_0 = arith.constant 0 : i32
    return %arg0, %arg1, %c0_i32 : i32, i32, i32
  }
}

</mosaic_0001>

<llo_original>
// kernel: tpu_custom_call.1
$region0: #{tpu_custom_call.1}
  #allocation0 [shape = 'u32[]', space=smem, size = 0x4, offset = 0x4, fixed_abs, tag = 'smem constant byte address 0x4 - core index']
  #allocation1 [shape = 'u32[144,128]{1,0:T(1,128)}', space=vmem, size = 0x12000, scoped, tag = 'internal scratch']
  %s0 = inlined_call_operand.hbm [shape: bf16[2,256,128], index: 0, kind: input, shape index: {}]
  %s1 = inlined_call_operand.hbm [shape: bf16[128,128], index: 1, kind: input, shape index: {}]
  %s2 = inlined_call_operand.vmem [shape: f32[1,128], index: 2, kind: input, shape index: {}]
  %s3 = inlined_call_operand.hbm [shape: bf16[2,256,128], index: 3, kind: output, shape index: {}]
  %s4 = sld [smem:[#allocation0]]
  $region53: #{tpu_custom_call.1} parent=0
    _
  %s6 = ssub.s32 1, %s4
  %s7 = scalar_select 0, %s6, %s4
  $region1: #{tpu_custom_call.1} parent=0
    #allocation2 [shape = 'u8[65536]{0}', space=vmem, size = 0x10000, scoped, tag = 'input window, operand 0']
    #allocation3 [shape = 's32[2]{0}', space=sflag, size = 0x8, scoped, tag = 'scoped memory for tpu_custom_call.1']
    #allocation4 [shape = 's32[2]{0}', space=sflag, size = 0x8, scoped, tag = 'scoped memory for tpu_custom_call.1']
    #allocation5 [shape = 'u8[32768]{0}', space=vmem, size = 0x8000, scoped, tag = 'input window, operand 1, single buffered']
    #allocation6 [shape = 's32[1]{0}', space=sflag, size = 0x4, scoped, tag = 'scoped memory for tpu_custom_call.1']
    #allocation7 [shape = 'u8[65536]{0}', space=vmem, size = 0x10000, scoped, tag = 'output window, operand 0']
    %8 = vsyncpa [#allocation3], 0
    %s9 = scalar_lea.sflag [#allocation3], 1
    %10 = vsyncpa %s9, 0
    %11 = vsyncpa [#allocation6], 0
    %12 = vsyncpa [#allocation4], 0
    %s13 = scalar_lea.sflag [#allocation4], 1
    %14 = vsyncpa %s13, 0
    loop: start=0, step=1, limit=6
    $region2: #{tpu_custom_call.1} parent=1 // loop_pre_header
      _
    $region3: #{tpu_custom_call.1} parent=1 // loop_header
      %s16 = sphi 0, %s20
      %p17 = scmp.ge.s32.totalorder %s16, 6
      %s23 = sphi 0, %s35
      %s24 = sphi 0, %s31
      %s25 = sphi 0, %s23
      %s26 = sphi 0, %s24
      %s27 = sphi 0, %s25
      %s28 = sphi 0, %s26
      %s40 = sphi 0, %s42
      %s43 = sphi 0, %s40
      %s44 = sphi 0, %s43
      %s60 = sphi 0, %s44
      %s64 = sphi 0, %s64
      %s66 = sphi 0, %s64
      %s67 = sphi 0, %s66
      %s81 = sphi 0, %s67
      %s85 = sphi 0, %s85
      %s87 = sphi 0, %s85
      %s88 = sphi 0, %s87
      %s102 = sphi 0, %s88
      %s110 = sphi 0, %s112
      %s113 = sphi 0, %s110
      %s114 = sphi 0, %s113
      %s130 = sphi 0, %s114
    $region4: #{tpu_custom_call.1} parent=1 // loop_header_branch
      %19 = sbr.rel (%p17) target = $region8
    $region5: #{tpu_custom_call.1} parent=1 // loop_body
      %s21 = ssub.s32 %s16, 1
      %s22 = ssub.s32 %s16, 2
      %s29 = sadd.s32 1, %s24
      %p30 = scmp.ge.s32.totalorder %s29, 2
      %s31 = scalar_select %p30, 0, %s29
      %s32 = sadd.s32 1, %s23
      %s33 = scalar_select %p30, %s32, %s23
      %p34 = scmp.ge.s32.totalorder %s33, 2
      %s35 = scalar_select %p34, 0, %s33
      %s36 = ssub.s32 %s23, %s35
      %s37 = ssub.s32 %s24, %s31
      %s38 = sor.u32 %s36, %s37
      %p39 = scmp.eq.s32.totalorder %s38, 0
      %s41 = sadd.s32 %s40, 1
      %s42 = scalar_select %p39, %s40, %s41
      %p45 = pneg %p39
      %p46 = scmp.eq.s32.totalorder %s16, 3
      %p47 = por %p45, %p46
      %p48 = scmp.ne.s32.totalorder %s40, %s43
      %p49 = scmp.eq.s32.totalorder %s16, 0
      %p50 = por %p48, %p49
      %p51 = scmp.ne.s32.totalorder %s40, %s43
      %p52 = scmp.eq.s32.totalorder %s21, 3
      %p53 = por %p51, %p52
      %p54 = scmp.ne.s32.totalorder %s43, %s44
      %p55 = scmp.eq.s32.totalorder %s21, 0
      %p56 = por %p54, %p55
      %p57 = scmp.ne.s32.totalorder %s43, %s44
      %p58 = scmp.eq.s32.totalorder %s22, 3
      %p59 = por %p57, %p58
      %p61 = scmp.ne.s32.totalorder %s44, %s60
      %p62 = scmp.eq.s32.totalorder %s22, 0
      %p63 = por %p61, %p62
      %s65 = sadd.s32 %s64, 1
      %p68 = scmp.eq.s32.totalorder %s16, 3
      %p69 = scmp.ne.s32.totalorder %s64, %s66
      %p70 = scmp.eq.s32.totalorder %s16, 0
      %p71 = por %p69, %p70
      %p72 = scmp.ne.s32.totalorder %s64, %s66
      %p73 = scmp.eq.s32.totalorder %s21, 3
      %p74 = por %p72, %p73
      %p75 = scmp.ne.s32.totalorder %s66, %s67
      %p76 = scmp.eq.s32.totalorder %s21, 0
      %p77 = por %p75, %p76
      %p78 = scmp.ne.s32.totalorder %s66, %s67
      %p79 = scmp.eq.s32.totalorder %s22, 3
      %p80 = por %p78, %p79
      %p82 = scmp.ne.s32.totalorder %s67, %s81
      %p83 = scmp.eq.s32.totalorder %s22, 0
      %p84 = por %p82, %p83
      %s86 = sadd.s32 %s85, 1
      %p89 = scmp.eq.s32.totalorder %s16, 3
      %p90 = scmp.ne.s32.totalorder %s85, %s87
      %p91 = scmp.eq.s32.totalorder %s16, 0
      %p92 = por %p90, %p91
      %p93 = scmp.ne.s32.totalorder %s85, %s87
      %p94 = scmp.eq.s32.totalorder %s21, 3
      %p95 = por %p93, %p94
      %p96 = scmp.ne.s32.totalorder %s87, %s88
      %p97 = scmp.eq.s32.totalorder %s21, 0
      %p98 = por %p96, %p97
      %p99 = scmp.ne.s32.totalorder %s87, %s88
      %p100 = scmp.eq.s32.totalorder %s22, 3
      %p101 = por %p99, %p100
      %p103 = scmp.ne.s32.totalorder %s88, %s102
      %p104 = scmp.eq.s32.totalorder %s22, 0
      %p105 = por %p103, %p104
      %s106 = ssub.s32 %s23, %s35
      %s107 = ssub.s32 %s24, %s31
      %s108 = sor.u32 %s106, %s107
      %p109 = scmp.eq.s32.totalorder %s108, 0
      %s111 = sadd.s32 %s110, 1
      %s112 = scalar_select %p109, %s110, %s111
      %p115 = pneg %p109
      %p116 = scmp.eq.s32.totalorder %s16, 3
      %p117 = por %p115, %p116
      %p118 = scmp.ne.s32.totalorder %s110, %s113
      %p119 = scmp.eq.s32.totalorder %s16, 0
      %p120 = por %p118, %p119
      %p121 = scmp.ne.s32.totalorder %s110, %s113
      %p122 = scmp.eq.s32.totalorder %s21, 3
      %p123 = por %p121, %p122
      %p124 = scmp.ne.s32.totalorder %s113, %s114
      %p125 = scmp.eq.s32.totalorder %s21, 0
      %p126 = por %p124, %p125
      %p127 = scmp.ne.s32.totalorder %s113, %s114
      %p128 = scmp.eq.s32.totalorder %s22, 3
      %p129 = por %p127, %p128
      %p131 = scmp.ne.s32.totalorder %s114, %s130
      %p132 = scmp.eq.s32.totalorder %s22, 0
      %p133 = por %p131, %p132
      %p134 = scmp.le.s32.totalorder 1, %s16
      %p135 = scmp.lt.s32.totalorder %s16, 5
      %p136 = pnand %p134, %p135
      %p137 = pneg %p136
      // Predicated region
      $region9: #{tpu_custom_call.1} parent=5 // pred_check
        _
      $region10: #{tpu_custom_call.1} parent=5 // pred_check_branch
        %139 = sbr.rel (%p136) target = $region12
      $region11: #{tpu_custom_call.1} parent=5 // pred_region
        %s140 = ssub.s32 %s16, 1
        // Predicated region
        $region13: #{tpu_custom_call.1} parent=11 // pred_check
          %p141 = pneg %p77
        $region14: #{tpu_custom_call.1} parent=11 // pred_check_branch
          %143 = sbr.rel (%p141) target = $region16
        $region15: #{tpu_custom_call.1} parent=11 // pred_region
          %s145 = ssub.s32 1024, 1024
          %146 = vsyncadd [#allocation6], %s145
          %s147 = sshll.u32 [#allocation5], 4
          %s148 = int_to_ptr.vmem [resolvable:$true] %s147
          %153 = dma.hbm_to_vmem [thread:$0]  %s1, 1024, %s148, [#allocation6], 64, 64, 4
        $region16: #{tpu_custom_call.1} parent=11 // pred_fallthru
          _
        // Predicated region
        $region17: #{tpu_custom_call.1} parent=11 // pred_check
          %p154 = pneg %p98
        $region18: #{tpu_custom_call.1} parent=11 // pred_check_branch
          %156 = sbr.rel (%p154) target = $region20
        $region19: #{tpu_custom_call.1} parent=11 // pred_region
          _
        $region20: #{tpu_custom_call.1} parent=11 // pred_fallthru
          _
      $region12: #{tpu_custom_call.1} parent=5 // pred_fallthru
        _
      %p157 = scmp.lt.s32.totalorder %s16, 4
      // Predicated region
      $region21: #{tpu_custom_call.1} parent=5 // pred_check
        %p158 = pneg %p157
      $region22: #{tpu_custom_call.1} parent=5 // pred_check_branch
        %160 = sbr.rel (%p158) target = $region24
      $region23: #{tpu_custom_call.1} parent=5 // pred_region
        // Predicated region
        $region25: #{tpu_custom_call.1} parent=23 // pred_check
          %p161 = pneg %p50
        $region26: #{tpu_custom_call.1} parent=23 // pred_check_branch
          %163 = sbr.rel (%p161) target = $region28
        $region27: #{tpu_custom_call.1} parent=23 // pred_region
          %s164 = sand.u32 %s40, 1
          %s165 = scalar_lea.sflag [#allocation3], %s164
          %s166 = sand.u32 %s40, 1
          %s167 = smul.addr %s166, 64
          %s168 = scalar_lea.vmem [#allocation2], %s167
          %s169 = smul.u32 16, %s24
          %s171 = ssub.s32 1024, 1024
          %172 = vsyncadd %s165, %s171
          %s173 = smul.addr %s23, 32
          %s174 = sadd.s32 %s169, %s173
          %s175 = smul.addr %s174, 64
          %s176 = scalar_lea.hbm %s0, %s175
          %s177 = sshll.u32 %s168, 4
          %s178 = int_to_ptr.vmem [resolvable:$true] %s177
          %183 = dma.hbm_to_vmem [thread:$0]  %s176, 1024, %s178, %s165, 64, 64, 4
        $region28: #{tpu_custom_call.1} parent=23 // pred_fallthru
          _
      $region24: #{tpu_custom_call.1} parent=5 // pred_fallthru
        _
      %p184 = scmp.le.s32.totalorder 1, %s16
      %p185 = scmp.lt.s32.totalorder %s16, 5
      %p186 = pnand %p184, %p185
      %p187 = pneg %p186
      // Predicated region
      $region29: #{tpu_custom_call.1} parent=5 // pred_check
        _
      $region30: #{tpu_custom_call.1} parent=5 // pred_check_branch
        %189 = sbr.rel (%p186) target = $region32
      $region31: #{tpu_custom_call.1} parent=5 // pred_region
        %s190 = ssub.s32 %s16, 1
        %s191 = sand.u32 %s43, 1
        %s192 = scalar_lea.sflag [#allocation3], %s191
        %s193 = sand.u32 %s43, 1
        %s194 = smul.addr %s193, 64
        %s195 = scalar_lea.vmem [#allocation2], %s194
        // Predicated region
        $region33: #{tpu_custom_call.1} parent=31 // pred_check
          %p196 = pneg %p56
        $region34: #{tpu_custom_call.1} parent=31 // pred_check_branch
          %198 = sbr.rel (%p196) target = $region36
        $region35: #{tpu_custom_call.1} parent=31 // pred_region
          %199 = dma.done %s192, 1024
        $region36: #{tpu_custom_call.1} parent=31 // pred_fallthru
          _
        // Predicated region
        $region37: #{tpu_custom_call.1} parent=31 // pred_check
          %p200 = pneg %p77
        $region38: #{tpu_custom_call.1} parent=31 // pred_check_branch
          %202 = sbr.rel (%p200) target = $region40
        $region39: #{tpu_custom_call.1} parent=31 // pred_region
          %203 = dma.done [#allocation6], 1024
        $region40: #{tpu_custom_call.1} parent=31 // pred_fallthru
          _
        %s204 = sand.u32 %s43, 1
        %s205 = scalar_lea.sflag [#allocation3], %s204
        %s206 = sand.u32 %s43, 1
        %s207 = smul.addr %s206, 64
        %s208 = scalar_lea.vmem [#allocation2], %s207
        %p209 = pneg %p56
        %p210 = pneg %p53
        %p211 = pneg %p77
        %p212 = pneg %p74
        %p213 = pneg %p98
        %p214 = pneg %p95
        %p215 = pneg %p126
        %p216 = pneg %p123
        %s217 = sand.u32 %s113, 1
        %s218 = scalar_lea.sflag [#allocation4], %s217
        %s219 = sand.u32 %s113, 1
        %s220 = smul.addr %s219, 64
        %s221 = scalar_lea.vmem [#allocation7], %s220
        %s222 = smul.u32 16, %s26
        %s223 = smul.u32 16, %s26
        %v225 = vld [vmem:[%s195] sm:$0xf]
        %v226 = vld [vmem:[%s195 + $0x4] sm:$0xf]
        %v227 = vld [vmem:[%s195 + $0x8] sm:$0xf]
        %v228 = vld [vmem:[%s195 + $0xc] sm:$0xf]
        %v229 = vld [vmem:[%s195 + $0x10] sm:$0xf]
        %v230 = vld [vmem:[%s195 + $0x14] sm:$0xf]
        %v231 = vld [vmem:[%s195 + $0x18] sm:$0xf]
        %v232 = vld [vmem:[%s195 + $0x1c] sm:$0xf]
        %v233 = vld [vmem:[%s195 + $0x20] sm:$0xf]
        %v234 = vld [vmem:[%s195 + $0x24] sm:$0xf]
        %v235 = vld [vmem:[%s195 + $0x28] sm:$0xf]
        %v236 = vld [vmem:[%s195 + $0x2c] sm:$0xf]
        %v237 = vld [vmem:[%s195 + $0x30] sm:$0xf]
        %v238 = vld [vmem:[%s195 + $0x34] sm:$0xf]
        %v239 = vld [vmem:[%s195 + $0x38] sm:$0xf]
        %v240 = vld [vmem:[%s195 + $0x3c] sm:$0xf]
        %v241 = vld [vmem:[#allocation5] sm:$0xf]
        %v242 = vld [vmem:[#allocation5 + $0x4] sm:$0xf]
        %v243 = vld [vmem:[#allocation5 + $0x8] sm:$0xf]
        %v244 = vld [vmem:[#allocation5 + $0xc] sm:$0xf]
        %v245 = vld [vmem:[#allocation5 + $0x10] sm:$0xf]
        %v246 = vld [vmem:[#allocation5 + $0x14] sm:$0xf]
        %v247 = vld [vmem:[#allocation5 + $0x18] sm:$0xf]
        %v248 = vld [vmem:[#allocation5 + $0x1c] sm:$0xf]
        %v249 = vld [vmem:[#allocation5 + $0x20] sm:$0xf]
        %v250 = vld [vmem:[#allocation5 + $0x24] sm:$0xf]
        %v251 = vld [vmem:[#allocation5 + $0x28] sm:$0xf]
        %v252 = vld [vmem:[#allocation5 + $0x2c] sm:$0xf]
        %v253 = vld [vmem:[#allocation5 + $0x30] sm:$0xf]
        %v254 = vld [vmem:[#allocation5 + $0x34] sm:$0xf]
        %v255 = vld [vmem:[#allocation5 + $0x38] sm:$0xf]
        %v256 = vld [vmem:[#allocation5 + $0x3c] sm:$0xf]
        %v257 = vld [vmem:[%s2] sm:$0x1]
        %v259 = vlaneseq
        %v260 = vshrl.u32 %v259, 7
        %v261 = vsub.s32 0, %v260
        %v262 = vrot.slane %v257, %v261
        %v280 = vunpack.c.l.b16 %v225
        %v281 = vunpack.c.l.b16 %v226
        %v282 = vunpack.c.l.b16 %v227
        %v283 = vunpack.c.l.b16 %v228
        %v284 = vunpack.c.l.b16 %v229
        %v285 = vunpack.c.l.b16 %v230
        %v286 = vunpack.c.l.b16 %v231
        %v287 = vunpack.c.l.b16 %v232
        %v288 = vunpack.c.l.b16 %v233
        %v289 = vunpack.c.l.b16 %v234
        %v290 = vunpack.c.l.b16 %v235
        %v291 = vunpack.c.l.b16 %v236
        %v292 = vunpack.c.l.b16 %v237
        %v293 = vunpack.c.l.b16 %v238
        %v294 = vunpack.c.l.b16 %v239
        %v295 = vunpack.c.l.b16 %v240
        %v296 = vpack.c.b16 %v281, %v280
        %v297 = vpack.c.b16 %v283, %v282
        %v298 = vpack.c.b16 %v285, %v284
        %v299 = vpack.c.b16 %v287, %v286
        %v300 = vpack.c.b16 %v289, %v288
        %v301 = vpack.c.b16 %v291, %v290
        %v302 = vpack.c.b16 %v293, %v292
        %v303 = vpack.c.b16 %v295, %v294
        %v328 = vunpack.c.l.b16 %v241
        %v329 = vunpack.c.l.b16 %v242
        %v330 = vunpack.c.l.b16 %v243
        %v331 = vunpack.c.l.b16 %v244
        %v332 = vunpack.c.l.b16 %v245
        %v333 = vunpack.c.l.b16 %v246
        %v334 = vunpack.c.l.b16 %v247
        %v335 = vunpack.c.l.b16 %v248
        %v336 = vunpack.c.l.b16 %v249
        %v337 = vunpack.c.l.b16 %v250
        %v338 = vunpack.c.l.b16 %v251
        %v339 = vunpack.c.l.b16 %v252
        %v340 = vunpack.c.l.b16 %v253
        %v341 = vunpack.c.l.b16 %v254
        %v342 = vunpack.c.l.b16 %v255
        %v343 = vunpack.c.l.b16 %v256
        %v344 = vpack.c.b16 %v329, %v328
        %v345 = vpack.c.b16 %v331, %v330
        %v346 = vpack.c.b16 %v333, %v332
        %v347 = vpack.c.b16 %v335, %v334
        %v348 = vpack.c.b16 %v337, %v336
        %v349 = vpack.c.b16 %v339, %v338
        %v350 = vpack.c.b16 %v341, %v340
        %v351 = vpack.c.b16 %v343, %v342
        %360 = vmatprep.subr.bf16.mxu0 0
        %361 = vmatpush1.bf16.msra.mxu0 %v344
        %362 = vmatprep.subr.bf16.mxu0 0
        %363 = vmatpush1.bf16.msra.mxu0 %v345
        %364 = vmatprep.subr.bf16.mxu0 0
        %365 = vmatpush1.bf16.msra.mxu0 %v346
        %366 = vmatprep.subr.bf16.mxu0 0
        %367 = vmatpush1.bf16.msra.mxu0 %v347
        %368 = vmatprep.subr.bf16.mxu0 0
        %369 = vmatpush1.bf16.msra.mxu0 %v348
        %370 = vmatprep.subr.bf16.mxu0 0
        %371 = vmatpush1.bf16.msra.mxu0 %v349
        %372 = vmatprep.subr.bf16.mxu0 0
        %373 = vmatpush1.bf16.msra.mxu0 %v350
        %374 = vmatprep.subr.bf16.mxu0 0
        %375 = vmatpush1.bf16.msra.mxu0 %v351
        %376 = vmatprep.subr.bf16.mxu0 0
        %377 = vmatpush1.bf16.msra.mxu0 0
        %378 = vmatprep.subr.bf16.mxu0 0
        %379 = vmatpush1.bf16.msra.mxu0 0
        %380 = vmatprep.subr.bf16.mxu0 0
        %381 = vmatpush1.bf16.msra.mxu0 0
        %382 = vmatprep.subr.bf16.mxu0 0
        %383 = vmatpush1.bf16.msra.mxu0 0
        %384 = vmatprep.subr.bf16.mxu0 0
        %385 = vmatpush1.bf16.msra.mxu0 0
        %386 = vmatprep.subr.bf16.mxu0 0
        %387 = vmatpush1.bf16.msra.mxu0 0
        %388 = vmatprep.subr.bf16.mxu0 0
        %389 = vmatpush1.bf16.msra.mxu0 0
        %390 = vmatprep.subr.bf16.mxu0 0
        %391 = vmatpush1.bf16.msra.mxu0 0
        %392 = vmatprep.mubr.bf16.mxu0 0
        %393 = vmatmul.mubr.bf16.gmra.mrb[0].mxu0 %v296
        %v394 = vpop.f32.mrb[0].mxu0
        %v395 = vadd.f32 %v262, %v394
        %v396 = vpop.f32.mrb[0].mxu0
        %v397 = vpop.f32.mrb[0].mxu0
        %v398 = vadd.f32 %v262, %v397
        %v399 = vpop.f32.mrb[0].mxu0
        %400 = vmatprep.mubr.bf16.mxu0 0
        %401 = vmatmul.mubr.bf16.gmra.mrb[0].mxu0 %v297
        %v402 = vpop.f32.mrb[0].mxu0
        %v403 = vadd.f32 %v262, %v402
        %v404 = vpop.f32.mrb[0].mxu0
        %v405 = vpop.f32.mrb[0].mxu0
        %v406 = vadd.f32 %v262, %v405
        %v407 = vpop.f32.mrb[0].mxu0
        %408 = vmatprep.mubr.bf16.mxu0 0
        %409 = vmatmul.mubr.bf16.gmra.mrb[0].mxu0 %v298
        %v410 = vpop.f32.mrb[0].mxu0
        %v411 = vadd.f32 %v262, %v410
        %v412 = vpop.f32.mrb[0].mxu0
        %v413 = vpop.f32.mrb[0].mxu0
        %v414 = vadd.f32 %v262, %v413
        %v415 = vpop.f32.mrb[0].mxu0
        %416 = vmatprep.mubr.bf16.mxu0 0
        %417 = vmatmul.mubr.bf16.gmra.mrb[0].mxu0 %v299
        %v418 = vpop.f32.mrb[0].mxu0
        %v419 = vadd.f32 %v262, %v418
        %v420 = vpop.f32.mrb[0].mxu0
        %v421 = vpop.f32.mrb[0].mxu0
        %v422 = vadd.f32 %v262, %v421
        %v423 = vpop.f32.mrb[0].mxu0
        %424 = vmatprep.mubr.bf16.mxu0 0
        %425 = vmatmul.mubr.bf16.gmra.mrb[0].mxu0 %v300
        %v426 = vpop.f32.mrb[0].mxu0
        %v427 = vadd.f32 %v262, %v426
        %v428 = vpop.f32.mrb[0].mxu0
        %v429 = vpop.f32.mrb[0].mxu0
        %v430 = vadd.f32 %v262, %v429
        %v431 = vpop.f32.mrb[0].mxu0
        %432 = vmatprep.mubr.bf16.mxu0 0
        %433 = vmatmul.mubr.bf16.gmra.mrb[0].mxu0 %v301
        %v434 = vpop.f32.mrb[0].mxu0
        %v435 = vadd.f32 %v262, %v434
        %v436 = vpop.f32.mrb[0].mxu0
        %v437 = vpop.f32.mrb[0].mxu0
        %v438 = vadd.f32 %v262, %v437
        %v439 = vpop.f32.mrb[0].mxu0
        %440 = vmatprep.mubr.bf16.mxu0 0
        %441 = vmatmul.mubr.bf16.gmra.mrb[0].mxu0 %v302
        %v442 = vpop.f32.mrb[0].mxu0
        %v443 = vadd.f32 %v262, %v442
        %v444 = vpop.f32.mrb[0].mxu0
        %v445 = vpop.f32.mrb[0].mxu0
        %v446 = vadd.f32 %v262, %v445
        %v447 = vpop.f32.mrb[0].mxu0
        %448 = vmatprep.mubr.bf16.mxu0 0
        %449 = vmatmul.mubr.bf16.gmra.mrb[0].mxu0 %v303
        %v450 = vpop.f32.mrb[0].mxu0
        %v451 = vadd.f32 %v262, %v450
        %v452 = vpop.f32.mrb[0].mxu0
        %v453 = vpop.f32.mrb[0].mxu0
        %v454 = vadd.f32 %v262, %v453
        %v455 = vpop.f32.mrb[0].mxu0
        %456 = vdwg.mxu0
        %v457 = vpack.c.bf16 %v398, %v395
        %v458 = vpack.c.bf16 %v406, %v403
        %v459 = vpack.c.bf16 %v414, %v411
        %v460 = vpack.c.bf16 %v422, %v419
        %v461 = vpack.c.bf16 %v430, %v427
        %v462 = vpack.c.bf16 %v438, %v435
        %v463 = vpack.c.bf16 %v446, %v443
        %v464 = vpack.c.bf16 %v454, %v451
        %v473 = vunpack.c.l.b16 %v457
        %v474 = vunpack.c.h.b16 %v457
        %v475 = vunpack.c.l.b16 %v458
        %v476 = vunpack.c.h.b16 %v458
        %v477 = vunpack.c.l.b16 %v459
        %v478 = vunpack.c.h.b16 %v459
        %v479 = vunpack.c.l.b16 %v460
        %v480 = vunpack.c.h.b16 %v460
        %v481 = vunpack.c.l.b16 %v461
        %v482 = vunpack.c.h.b16 %v461
        %v483 = vunpack.c.l.b16 %v462
        %v484 = vunpack.c.h.b16 %v462
        %v485 = vunpack.c.l.b16 %v463
        %v486 = vunpack.c.h.b16 %v463
        %v487 = vunpack.c.l.b16 %v464
        %v488 = vunpack.c.h.b16 %v464
        %v489 = vpack.c.b16 %v473, %v473
        %v490 = vpack.c.b16 %v474, %v474
        %v491 = vpack.c.b16 %v475, %v475
        %v492 = vpack.c.b16 %v476, %v476
        %v493 = vpack.c.b16 %v477, %v477
        %v494 = vpack.c.b16 %v478, %v478
        %v495 = vpack.c.b16 %v479, %v479
        %v496 = vpack.c.b16 %v480, %v480
        %v497 = vpack.c.b16 %v481, %v481
        %v498 = vpack.c.b16 %v482, %v482
        %v499 = vpack.c.b16 %v483, %v483
        %v500 = vpack.c.b16 %v484, %v484
        %v501 = vpack.c.b16 %v485, %v485
        %v502 = vpack.c.b16 %v486, %v486
        %v503 = vpack.c.b16 %v487, %v487
        %v504 = vpack.c.b16 %v488, %v488
        %521 = vst [vmem:[%s221] sm:$0xf] %v489
        %522 = vst [vmem:[%s221 + $0x4] sm:$0xf] %v490
        %523 = vst [vmem:[%s221 + $0x8] sm:$0xf] %v491
        %524 = vst [vmem:[%s221 + $0xc] sm:$0xf] %v492
        %525 = vst [vmem:[%s221 + $0x10] sm:$0xf] %v493
        %526 = vst [vmem:[%s221 + $0x14] sm:$0xf] %v494
        %527 = vst [vmem:[%s221 + $0x18] sm:$0xf] %v495
        %528 = vst [vmem:[%s221 + $0x1c] sm:$0xf] %v496
        %529 = vst [vmem:[%s221 + $0x20] sm:$0xf] %v497
        %530 = vst [vmem:[%s221 + $0x24] sm:$0xf] %v498
        %531 = vst [vmem:[%s221 + $0x28] sm:$0xf] %v499
        %532 = vst [vmem:[%s221 + $0x2c] sm:$0xf] %v500
        %533 = vst [vmem:[%s221 + $0x30] sm:$0xf] %v501
        %534 = vst [vmem:[%s221 + $0x34] sm:$0xf] %v502
        %535 = vst [vmem:[%s221 + $0x38] sm:$0xf] %v503
        %536 = vst [vmem:[%s221 + $0x3c] sm:$0xf] %v504
        %s537 = sand.u32 %s113, 1
        %s538 = scalar_lea.sflag [#allocation4], %s537
        %s539 = sand.u32 %s113, 1
        %s540 = smul.addr %s539, 64
        %s541 = scalar_lea.vmem [#allocation7], %s540
        // Predicated region
        $region41: #{tpu_custom_call.1} parent=31 // pred_check
          %p542 = pneg %p123
        $region42: #{tpu_custom_call.1} parent=31 // pred_check_branch
          %544 = sbr.rel (%p542) target = $region44
        $region43: #{tpu_custom_call.1} parent=31 // pred_region
          %s545 = smul.u32 16, %s26
          %s547 = ssub.s32 1024, 1024
          %548 = vsyncadd %s538, %s547
          %s549 = smul.addr %s25, 32
          %s550 = sadd.s32 %s545, %s549
          %s551 = smul.addr %s550, 64
          %s552 = scalar_lea.hbm %s3, %s551
          %s553 = sshll.u32 %s541, 4
          %s554 = int_to_ptr.vmem [resolvable:$true] %s553
          %559 = dma.vmem_to_hbm [thread:$0]  %s554, 1024, %s552, %s538, 64, 64, 4
        $region44: #{tpu_custom_call.1} parent=31 // pred_fallthru
          _
      $region32: #{tpu_custom_call.1} parent=5 // pred_fallthru
        _
      %p560 = scmp.le.s32.totalorder 2, %s16
      // Predicated region
      $region45: #{tpu_custom_call.1} parent=5 // pred_check
        %p561 = pneg %p560
      $region46: #{tpu_custom_call.1} parent=5 // pred_check_branch
        %563 = sbr.rel (%p561) target = $region48
      $region47: #{tpu_custom_call.1} parent=5 // pred_region
        %s564 = ssub.s32 %s16, 2
        // Predicated region
        $region49: #{tpu_custom_call.1} parent=47 // pred_check
          %p565 = pneg %p129
        $region50: #{tpu_custom_call.1} parent=47 // pred_check_branch
          %567 = sbr.rel (%p565) target = $region52
        $region51: #{tpu_custom_call.1} parent=47 // pred_region
          %s568 = sand.u32 %s114, 1
          %s569 = scalar_lea.sflag [#allocation4], %s568
          %s570 = sand.u32 %s114, 1
          %s571 = smul.addr %s570, 64
          %s572 = scalar_lea.vmem [#allocation7], %s571
          %573 = dma.done %s569, 1024
        $region52: #{tpu_custom_call.1} parent=47 // pred_fallthru
          _
      $region48: #{tpu_custom_call.1} parent=5 // pred_fallthru
        _
    $region6: #{tpu_custom_call.1} parent=1 // loop_footer
      %s20 = sadd.s32 1, %s16
    $region7: #{tpu_custom_call.1} parent=1 // loop_footer_branch
      %15 = sbr.rel target = $region3
    $region8: #{tpu_custom_call.1} parent=1 // loop_exit
      _
    %574 = vsyncpa [#allocation3], 1
    %s575 = scalar_lea.sflag [#allocation3], 1
    %576 = vsyncpa %s575, 1
    %577 = vsyncpa [#allocation6], 1
    %578 = vsyncpa [#allocation4], 1
    %s579 = scalar_lea.sflag [#allocation4], 1
    %580 = vsyncpa %s579, 1

</llo_original>
